<compile_context>
chip_gen: v5e
topology: v5e:2x2
jax: 0.10.0
libtpu: 0.0.40
codegen_flags: <defaults>
</compile_context>

<pallas_src>
import functools

import jax
import jax.numpy as jnp
from jax.experimental import pallas as pl
from jax.experimental.pallas import tpu as pltpu


def _last_time_step_kernel(h_ref, o_ref, *, num_directions, hidden):
    # h_ref: (num_directions, batch_tile, hidden)   -- last layer only
    # o_ref: (batch_tile, num_directions * hidden)
    if num_directions == 1:
        o_ref[...] = h_ref[0]
    elif hidden % 128 == 0:
        # Column offsets d*hidden are 128-aligned -> unmasked, lane-dense vst.
        for d in range(num_directions):
            o_ref[:, d * hidden:(d + 1) * hidden] = h_ref[d]
    else:
        # Unaligned per-direction stores would lower to masked vst.msk; build
        # the full-width row in registers (XLU shuffles) and store once.
        o_ref[...] = jnp.concatenate(
            [h_ref[d] for d in range(num_directions)], axis=-1)


def _pick_batch_tile(batch, out_width, dtype):
    """Largest sublane-aligned batch tile that fits a conservative VMEM budget."""
    itemsize = jnp.dtype(dtype).itemsize
    # Sublane packing: 8 rows (f32), 16 (bf16/f16), 32 (int8/fp8).
    sublane = max(8, 32 // max(itemsize, 1))
    if batch <= 2 * sublane:
        # Full-array block (trivially satisfies the (8,128) rule).
        return batch
    # Per batch row we hold one input row + one output row, each double
    # buffered: 4 * out_width * itemsize bytes.  Keep the working set well
    # under the smallest scoped-VMEM default (16 MiB on v5e).
    vmem_budget = 8 * 1024 * 1024
    rows = max(sublane, vmem_budget // (4 * out_width * itemsize))
    tb = min(batch, (rows // sublane) * sublane, 2048)
    return max(tb, sublane)


def last_time_step(fwd_input, rnn_layers=1, bidirectional=False):
    """JAX/Pallas equivalent of LastTimeStep.forward."""
    rnn_output, last_step = fwd_input  # rnn_output is unused (as in PyTorch)
    del rnn_output
    if isinstance(last_step, tuple):  # LSTM returns (h_n, c_n)
        last_step = last_step[0]

    num_directions = 2 if bidirectional else 1
    ld, batch, hidden = last_step.shape
    assert ld == rnn_layers * num_directions, (
        f"h_n leading dim {ld} != rnn_layers*num_directions "
        f"{rnn_layers * num_directions}")

    if num_directions == 1:
        # Pure slice of the last layer; no data movement worth a kernel —
        # let XLA fuse it into neighbouring ops.
        return last_step[rnn_layers - 1]

    out_width = num_directions * hidden
    dtype = last_step.dtype
    tb = _pick_batch_tile(batch, out_width, dtype)
    grid = (pl.cdiv(batch, tb),)

    kernel = functools.partial(
        _last_time_step_kernel,
        num_directions=num_directions,
        hidden=hidden,
    )

    return pl.pallas_call(
        kernel,
        out_shape=jax.ShapeDtypeStruct((batch, out_width), dtype),
        grid=grid,
        in_specs=[
            # Fetch ONLY the last layer: block of `num_directions` slices along
            # the leading axis, at block index rnn_layers-1 (= element offset
            # (rnn_layers-1)*num_directions).
            pl.BlockSpec((num_directions, tb, hidden),
                         lambda b: (rnn_layers - 1, b, 0)),
        ],
        out_specs=pl.BlockSpec((tb, out_width), lambda b: (b, 0)),
        compiler_params=pltpu.CompilerParams(
            dimension_semantics=("parallel",),   # batch tiles across TCs (v7x)
            vmem_limit_bytes=32 * 1024 * 1024,
        ),
    )(last_step)


def _reference(last_step, rnn_layers, bidirectional):
    num_directions = 2 if bidirectional else 1
    batch = last_step.shape[1]
    ls = last_step.reshape(rnn_layers, num_directions, batch, -1)
    ls = ls[rnn_layers - 1]                     # (D, B, H)
    ls = jnp.transpose(ls, (1, 0, 2))           # (B, D, H)
    return ls.reshape(batch, -1)                # (B, D*H)


if __name__ == "__main__":
    key = jax.random.PRNGKey(0)
    k_out, k_h, k_c, k_h2 = jax.random.split(key, 4)

    # --- Case 1: small bidirectional LSTM-style input (exercises the kernel,
    #             unaligned hidden -> in-register concat + single store path).
    rnn_layers = 2
    bidirectional = True
    num_directions = 2
    batch, seq, hidden = 2, 8, 32

    rnn_output = jax.random.normal(
        k_out, (batch, seq, num_directions * hidden), dtype=jnp.float32)
    h_n = jax.random.normal(
        k_h, (rnn_layers * num_directions, batch, hidden), dtype=jnp.float32)
    c_n = jax.random.normal(
        k_c, (rnn_layers * num_directions, batch, hidden), dtype=jnp.float32)

    out = last_time_step((rnn_output, (h_n, c_n)),
                         rnn_layers=rnn_layers, bidirectional=bidirectional)
    out = jax.block_until_ready(out)
    ref = _reference(h_n, rnn_layers, bidirectional)
    assert out.shape == (batch, num_directions * hidden), out.shape
    assert jnp.allclose(out, ref), "Pallas output mismatch vs reference (case 1)"

    # --- Case 2: 128-aligned hidden + sublane-aligned batch (exercises the
    #             tiled, lane-dense per-direction store path).
    rnn_layers2, batch2, hidden2 = 3, 64, 128
    h_n2 = jax.random.normal(
        k_h2, (rnn_layers2 * 2, batch2, hidden2), dtype=jnp.float32)
    out2 = last_time_step((None, h_n2), rnn_layers=rnn_layers2,
                          bidirectional=True)
    out2 = jax.block_until_ready(out2)
    ref2 = _reference(h_n2, rnn_layers2, True)
    assert jnp.allclose(out2, ref2), "Pallas output mismatch vs reference (case 2)"

    # --- Case 3: unidirectional short-circuit (plain JAX slice, no kernel).
    out3 = last_time_step((rnn_output, h_n), rnn_layers=4, bidirectional=False)
    out3 = jax.block_until_ready(out3)
    ref3 = _reference(h_n, 4, False)
    assert jnp.allclose(out3, ref3), "Unidirectional path mismatch vs reference"

    print("KERNEL_OK")
</pallas_src>

<mosaic_0001>
module attributes {stable_mosaic.version = 11 : i64} {
  func.func @_last_time_step_kernel(%arg0: i32, %arg1: memref<2x2x32xf32, #tpu.memory_space<vmem>>, %arg2: memref<2x64xf32, #tpu.memory_space<vmem>>) attributes {dimension_semantics = [#tpu.dimension_semantics<parallel>], iteration_bounds = array<i64: 1>, scalar_prefetch = 0 : i64, scratch_operands = 0 : i64, tpu.core_type = #tpu.core_type<tc>, window_params = [{transform_indices = @transform_0, window_bounds = array<i64: 2, 2, 32>}, {transform_indices = @transform_1, window_bounds = array<i64: 2, 64>}]} {
    %c0 = arith.constant 0 : index
    %c0_0 = arith.constant 0 : index
    %c0_1 = arith.constant 0 : index
    %0 = vector.load %arg1[%c0, %c0_0, %c0_1] : memref<2x2x32xf32, #tpu.memory_space<vmem>>, vector<1x2x32xf32>
    %1 = vector.shape_cast %0 : vector<1x2x32xf32> to vector<2x32xf32>
    %c1 = arith.constant 1 : index
    %c0_2 = arith.constant 0 : index
    %c0_3 = arith.constant 0 : index
    %2 = vector.load %arg1[%c1, %c0_2, %c0_3] : memref<2x2x32xf32, #tpu.memory_space<vmem>>, vector<1x2x32xf32>
    %3 = vector.shape_cast %2 : vector<1x2x32xf32> to vector<2x32xf32>
    %4 = tpu.concatenate %1, %3 in 1 : vector<2x32xf32>, vector<2x32xf32> -> vector<2x64xf32>
    %c0_4 = arith.constant 0 : index
    %c0_5 = arith.constant 0 : index
    %5 = vector.load %arg2[%c0_4, %c0_5] : memref<2x64xf32, #tpu.memory_space<vmem>>, vector<2x64xf32>
    tpu.vector_store %arg2[%c0_4, %c0_5], %4 {strides = array<i32>} : memref<2x64xf32, #tpu.memory_space<vmem>>, vector<2x64xf32>,
    return
  }
  func.func @transform_0(%arg0: i32) -> (i32, i32, i32) {
    %c1_i32 = arith.constant 1 : i32
    %c0_i32 = arith.constant 0 : i32
    %c0_i32_0 = arith.constant 0 : i32
    return %c1_i32, %arg0, %c0_i32 : i32, i32, i32
  }
  func.func @transform_1(%arg0: i32) -> (i32, i32) {
    %c0_i32 = arith.constant 0 : i32
    %c0_i32_0 = arith.constant 0 : i32
    return %arg0, %c0_i32 : i32, i32
  }
}

</mosaic_0001>

<llo_original>
// kernel: tpu_custom_call.1
$region0: #{tpu_custom_call.1}
  #allocation0 [shape = 'u32[]', space=smem, size = 0x4, offset = 0x4, fixed_abs, tag = 'smem constant byte address 0x4 - core index']
  #allocation1 [shape = 'u32[72,128]{1,0:T(1,128)}', space=vmem, size = 0x9000, scoped, tag = 'internal scratch']
  %s0 = inlined_call_operand.hbm [shape: f32[4,2,32], index: 0, kind: input, shape index: {}]
  %s1 = inlined_call_operand.hbm [shape: f32[2,64], index: 1, kind: output, shape index: {}]
  %s2 = sld [smem:[#allocation0]]
  $region18: #{tpu_custom_call.1} parent=0
    _
  %s4 = ssub.s32 1, %s2
  %s5 = scalar_select 0, %s4, %s2
  $region1: #{tpu_custom_call.1} parent=0
    #allocation2 [shape = 'u8[2048]{0}', space=vmem, size = 0x800, scoped, tag = 'input window, operand 0, single buffered']
    #allocation3 [shape = 's32[1]{0}', space=sflag, size = 0x4, scoped, tag = 'scoped memory for tpu_custom_call.1']
    #allocation4 [shape = 's32[1]{0}', space=sflag, size = 0x4, scoped, tag = 'scoped memory for tpu_custom_call.1']
    #allocation5 [shape = 'u8[1024]{0}', space=vmem, size = 0x400, scoped, tag = 'output window, operand 0, single buffered']
    %6 = vsyncpa [#allocation3], 0
    %7 = vsyncpa [#allocation4], 0
    // Predicated region
    $region2: #{tpu_custom_call.1} parent=1 // pred_check
      _
    $region3: #{tpu_custom_call.1} parent=1 // pred_check_branch
      %9 = sbr.rel (0) target = $region5
    $region4: #{tpu_custom_call.1} parent=1 // pred_region
      %11 = vsyncadd [#allocation3], 0
      %s12 = scalar_lea.hbm %s0, 4
      %s13 = sshll.u32 %s12, 4
      %s14 = int_to_ptr.hbm [resolvable:$true] %s13
      %s15 = sshll.u32 [#allocation2], 4
      %s16 = int_to_ptr.vmem [resolvable:$true] %s15
      %21 = dma.hbm_to_vmem [thread:$0]  %s14, 64, %s16, [#allocation3], 32, 32, 2
    $region5: #{tpu_custom_call.1} parent=1 // pred_fallthru
      _
    // Predicated region
    $region6: #{tpu_custom_call.1} parent=1 // pred_check
      _
    $region7: #{tpu_custom_call.1} parent=1 // pred_check_branch
      %23 = sbr.rel (0) target = $region9
    $region8: #{tpu_custom_call.1} parent=1 // pred_region
      %25 = dma.done [#allocation3], 64
    $region9: #{tpu_custom_call.1} parent=1 // pred_fallthru
      _
    %v26 = vld [vmem:[#allocation2] sm:$0x3]
    %s27 = scalar_lea.vmem [#allocation2], 2
    %v28 = vld [vmem:[%s27] sm:$0x3]
    %30 = vrot.lane.b32.xlu0 %v28, 32
    %v31 = vpop.permute.xlu0 %30
    %vm33 = vcmask 261120
    %v34 = vsel %vm33, %v26, %v31
    %vm35 = vcmask 517120
    %36 = vst.msk [vmem:[#allocation5] sm:$0x3] %vm35, %v34
    // Predicated region
    $region10: #{tpu_custom_call.1} parent=1 // pred_check
      _
    $region11: #{tpu_custom_call.1} parent=1 // pred_check_branch
      %38 = sbr.rel (0) target = $region13
    $region12: #{tpu_custom_call.1} parent=1 // pred_region
      %40 = vsyncadd [#allocation4], 0
      %s42 = sshll.u32 [#allocation5], 4
      %s43 = int_to_ptr.vmem [resolvable:$true] %s42
      %s44 = sshll.u32 %s1, 4
      %s45 = int_to_ptr.hbm [resolvable:$true] %s44
      %47 = dma.vmem_to_hbm [thread:$0]  %s43, 32, %s45, [#allocation4]
    $region13: #{tpu_custom_call.1} parent=1 // pred_fallthru
      _
    // Predicated region
    $region14: #{tpu_custom_call.1} parent=1 // pred_check
      _
    $region15: #{tpu_custom_call.1} parent=1 // pred_check_branch
      %49 = sbr.rel (0) target = $region17
    $region16: #{tpu_custom_call.1} parent=1 // pred_region
      %51 = dma.done [#allocation4], 32
    $region17: #{tpu_custom_call.1} parent=1 // pred_fallthru
      _
    %52 = vsyncpa [#allocation3], 1
    %53 = vsyncpa [#allocation4], 1

</llo_original>
